<compile_context>
chip_gen: v5e
topology: v5e:2x2
jax: 0.10.0
libtpu: 0.0.40
codegen_flags: <defaults>
</compile_context>

<pallas_src>
import functools

import jax
import jax.numpy as jnp
import numpy as np
from jax.experimental import pallas as pl
from jax.experimental.pallas import tpu as pltpu

INPUT_SHAPE = 4
H = 128
OUTPUT_SHAPE = 5

LANE = 128  # TPU lane width: batch tiles are multiples of this.

# Batch-tile cap.  Per-tile VMEM at TB=4096 (all f32): hidden (256, TB) ~= 4 MiB
# (plus at most one ReLU copy), x/out blocks (8-sublane padded, TB) = 128 KiB each
# x2 pipeline buffers, single-buffered weights < 0.3 MiB  =>  well under v5e's
# 16 MiB default scoped VMEM and v7x's 32 MiB scoped / 64 MiB physical VMEM.
MAX_BATCH_TILE = 4096


def _round_up(n, m):
    return ((n + m - 1) // m) * m


def _choose_batch_tile(batch):
    """Lane-aligned batch tile; prefers >=2 grid steps so both v7x TCs get work."""
    b_lane = _round_up(batch, LANE)
    if b_lane <= LANE:
        return b_lane                       # tiny batches (e.g. act()): one 128-wide tile
    half = _round_up(pl.cdiv(b_lane, 2), LANE)
    return min(MAX_BATCH_TILE, half)


def dueling_dqn_kernel(x_ref, w1_ref, b1_ref, w2_ref, b2_ref, o_ref):
    # x tile: (4, TB) f32, feature-major (batch on the lane axis); f32 MXU matmuls
    # with f32 accumulation, bias + ReLU on the VPU.
    h = jnp.dot(w1_ref[...], x_ref[...], preferred_element_type=jnp.float32)   # (256, TB)
    h = jnp.maximum(h + b1_ref[...], 0.0)                                      # (256, TB)
    out = jnp.dot(w2_ref[...], h, preferred_element_type=jnp.float32)          # (5, TB)
    o_ref[...] = out + b2_ref[...]


def fuse_params(p):
    """Fold both streams + the dueling combine into one 2-layer MLP (exact algebra),
    stored feature-major (transposed) for the lane-dense kernel.  All f32."""
    w1 = jnp.concatenate([p["w1a"], p["w1v"]], axis=1)                      # (4, 256)
    b1 = jnp.concatenate([p["b1a"], p["b1v"]], axis=1)                      # (1, 256)
    w2a_c = p["w2a"] - jnp.mean(p["w2a"], axis=1, keepdims=True)            # (128, 5)
    w2v_b = jnp.broadcast_to(p["w2v"], (H, OUTPUT_SHAPE))                   # (128, 5)
    w2 = jnp.concatenate([w2a_c, w2v_b], axis=0)                            # (256, 5)
    b2 = (p["b2a"] - jnp.mean(p["b2a"])) + p["b2v"]                         # (1, 5)
    return dict(
        w1t=w1.T.astype(jnp.float32),   # (256, 4)
        b1t=b1.T.astype(jnp.float32),   # (256, 1)
        w2t=w2.T.astype(jnp.float32),   # (5, 256)
        b2t=b2.T.astype(jnp.float32),   # (5, 1)
    )


@functools.partial(jax.jit, static_argnames=("batch_tile",))
def dueling_dqn_forward(x, fused, batch_tile=None):
    """x: (B, ...) with prod(...) == 4.  Returns (B, 5) f32 Q-values."""
    B = x.shape[0]
    # Flatten (x.view(B, -1)) and repack feature-major so the batch sits on the lane
    # axis.  The pad below fuses with this transpose into a single XLA copy, so there
    # is no standalone pad/slice pass over the kernel's HBM operands.
    xt = x.reshape(B, -1).astype(jnp.float32).T                             # (4, B)

    tb = batch_tile if batch_tile is not None else _choose_batch_tile(B)
    n_tiles = pl.cdiv(B, tb)
    b_pad = n_tiles * tb
    if b_pad != B:
        xt = jnp.pad(xt, ((0, 0), (0, b_pad - B)))

    out_t = pl.pallas_call(
        dueling_dqn_kernel,
        out_shape=jax.ShapeDtypeStruct((OUTPUT_SHAPE, b_pad), jnp.float32),
        grid=(n_tiles,),
        in_specs=[
            # x^T: batch-tiled along the lane axis (lane-dense blocks).
            pl.BlockSpec((INPUT_SHAPE, tb), lambda i: (0, i)),
            # Fused weights/biases: VMEM-resident, constant index_map, single-buffered
            # (no point double-buffering constants).
            pl.BlockSpec((2 * H, INPUT_SHAPE), lambda i: (0, 0),
                         pipeline_mode=pl.Buffered(1)),
            pl.BlockSpec((2 * H, 1), lambda i: (0, 0),
                         pipeline_mode=pl.Buffered(1)),
            pl.BlockSpec((OUTPUT_SHAPE, 2 * H), lambda i: (0, 0),
                         pipeline_mode=pl.Buffered(1)),
            pl.BlockSpec((OUTPUT_SHAPE, 1), lambda i: (0, 0),
                         pipeline_mode=pl.Buffered(1)),
        ],
        out_specs=pl.BlockSpec((OUTPUT_SHAPE, tb), lambda i: (0, i)),
        compiler_params=pltpu.CompilerParams(
            dimension_semantics=("parallel",)),
    )(xt, fused["w1t"], fused["b1t"], fused["w2t"], fused["b2t"])

    # Back to the module's (B, 5) batch-major convention (fuses with the slice).
    return out_t[:, :B].T


def init_params(key):
    """PyTorch-style Linear init: U(-1/sqrt(fan_in), 1/sqrt(fan_in)).
    Weights stored as (in_features, out_features)."""
    ks = jax.random.split(key, 8)

    def linear(kw, kb, fan_in, fan_out):
        bound = 1.0 / np.sqrt(fan_in)
        w = jax.random.uniform(kw, (fan_in, fan_out), jnp.float32, -bound, bound)
        b = jax.random.uniform(kb, (1, fan_out), jnp.float32, -bound, bound)
        return w, b

    w1a, b1a = linear(ks[0], ks[1], INPUT_SHAPE, H)
    w2a, b2a = linear(ks[2], ks[3], H, OUTPUT_SHAPE)
    w1v, b1v = linear(ks[4], ks[5], INPUT_SHAPE, H)
    w2v, b2v = linear(ks[6], ks[7], H, 1)
    return dict(w1a=w1a, b1a=b1a, w2a=w2a, b2a=b2a,
                w1v=w1v, b1v=b1v, w2v=w2v, b2v=b2v)


def reference_forward(x, p):
    """Exact float64 NumPy reference of the original (unfused) module."""
    xn = np.asarray(x, np.float64).reshape(x.shape[0], -1)
    q = {k: np.asarray(v, np.float64) for k, v in p.items()}
    ha = np.maximum(xn @ q["w1a"] + q["b1a"], 0.0)
    adv = ha @ q["w2a"] + q["b2a"]
    hv = np.maximum(xn @ q["w1v"] + q["b1v"], 0.0)
    val = hv @ q["w2v"] + q["b2v"]
    return val + adv - adv.mean(axis=1, keepdims=True)


if __name__ == "__main__":
    key = jax.random.PRNGKey(0)
    kx, kp = jax.random.split(key)

    params = init_params(kp)
    fused = fuse_params(params)

    # Small-shape check (batch=2, input_shape=4): single 128-lane tile.
    x = jax.random.normal(kx, (2, INPUT_SHAPE), dtype=jnp.float32)
    out = jax.block_until_ready(dueling_dqn_forward(x, fused))
    assert out.shape == (2, OUTPUT_SHAPE), out.shape
    ref = reference_forward(x, params)
    # All-f32 data path (no bf16 casts) -> tolerance tightened vs. the previous 2e-2;
    # the remaining budget only covers the MXU's internal f32 pass decomposition.
    np.testing.assert_allclose(np.asarray(out), ref, rtol=1e-2, atol=1e-2)

    # Larger batch exercises the multi-tile grid (2 tiles of 1280 lanes) + lane padding.
    xb = jax.random.normal(jax.random.PRNGKey(1), (2500, INPUT_SHAPE), dtype=jnp.float32)
    outb = jax.block_until_ready(dueling_dqn_forward(xb, fused))
    refb = reference_forward(xb, params)
    np.testing.assert_allclose(np.asarray(outb), refb, rtol=1e-2, atol=1e-2)

    print("KERNEL_OK")
</pallas_src>

<mosaic_0001>
module attributes {stable_mosaic.version = 11 : i64} {
  func.func @dueling_dqn_kernel(%arg0: i32, %arg1: memref<4x128xf32, #tpu.memory_space<vmem>>, %arg2: memref<256x4xf32, #tpu.memory_space<vmem>>, %arg3: memref<256x1xf32, #tpu.memory_space<vmem>>, %arg4: memref<5x256xf32, #tpu.memory_space<vmem>>, %arg5: memref<5x1xf32, #tpu.memory_space<vmem>>, %arg6: memref<5x128xf32, #tpu.memory_space<vmem>>) attributes {dimension_semantics = [#tpu.dimension_semantics<parallel>], iteration_bounds = array<i64: 1>, scalar_prefetch = 0 : i64, scratch_operands = 0 : i64, tpu.core_type = #tpu.core_type<tc>, window_params = [{transform_indices = @transform_0, window_bounds = array<i64: 4, 128>}, {pipeline_mode = #tpu.pipeline_mode<synchronous>, transform_indices = @transform_1, window_bounds = array<i64: 256, 4>}, {pipeline_mode = #tpu.pipeline_mode<synchronous>, transform_indices = @transform_2, window_bounds = array<i64: 256, 1>}, {pipeline_mode = #tpu.pipeline_mode<synchronous>, transform_indices = @transform_3, window_bounds = array<i64: 5, 256>}, {pipeline_mode = #tpu.pipeline_mode<synchronous>, transform_indices = @transform_4, window_bounds = array<i64: 5, 1>}, {transform_indices = @transform_5, window_bounds = array<i64: 5, 128>}]} {
    %c0 = arith.constant 0 : index
    %c0_0 = arith.constant 0 : index
    %0 = vector.load %arg2[%c0, %c0_0] : memref<256x4xf32, #tpu.memory_space<vmem>>, vector<256x4xf32>
    %c0_1 = arith.constant 0 : index
    %c0_2 = arith.constant 0 : index
    %1 = vector.load %arg1[%c0_1, %c0_2] : memref<4x128xf32, #tpu.memory_space<vmem>>, vector<4x128xf32>
    %cst = arith.constant dense<0.000000e+00> : vector<256x128xf32>
    %2 = tpu.matmul %0, %1, %cst {dimension_numbers = #tpu.dot_dimension_numbers<[1], [0], [0], [1], [0, 0, 1, 1], [], []>} : vector<256x4xf32>, vector<4x128xf32>, vector<256x128xf32> -> vector<256x128xf32>
    %c0_3 = arith.constant 0 : index
    %c0_4 = arith.constant 0 : index
    %3 = vector.load %arg3[%c0_3, %c0_4] : memref<256x1xf32, #tpu.memory_space<vmem>>, vector<256x1xf32>
    %4 = vector.broadcast %3 : vector<256x1xf32> to vector<256x128xf32>
    %5 = arith.addf %2, %4 : vector<256x128xf32>
    %cst_5 = arith.constant 0.000000e+00 : f32
    %6 = vector.broadcast %cst_5 : f32 to vector<256x128xf32>
    %7 = arith.maximumf %5, %6 : vector<256x128xf32>
    %c0_6 = arith.constant 0 : index
    %c0_7 = arith.constant 0 : index
    %8 = vector.load %arg4[%c0_6, %c0_7] : memref<5x256xf32, #tpu.memory_space<vmem>>, vector<5x256xf32>
    %cst_8 = arith.constant dense<0.000000e+00> : vector<5x128xf32>
    %9 = tpu.matmul %8, %7, %cst_8 {dimension_numbers = #tpu.dot_dimension_numbers<[1], [0], [0], [1], [0, 0, 1, 1], [], []>} : vector<5x256xf32>, vector<256x128xf32>, vector<5x128xf32> -> vector<5x128xf32>
    %c0_9 = arith.constant 0 : index
    %c0_10 = arith.constant 0 : index
    %10 = vector.load %arg5[%c0_9, %c0_10] : memref<5x1xf32, #tpu.memory_space<vmem>>, vector<5x1xf32>
    %11 = vector.broadcast %10 : vector<5x1xf32> to vector<5x128xf32>
    %12 = arith.addf %9, %11 : vector<5x128xf32>
    %c0_11 = arith.constant 0 : index
    %c0_12 = arith.constant 0 : index
    %13 = vector.load %arg6[%c0_11, %c0_12] : memref<5x128xf32, #tpu.memory_space<vmem>>, vector<5x128xf32>
    tpu.vector_store %arg6[%c0_11, %c0_12], %12 {strides = array<i32>} : memref<5x128xf32, #tpu.memory_space<vmem>>, vector<5x128xf32>,
    return
  }
  func.func @transform_0(%arg0: i32) -> (i32, i32) {
    %c0_i32 = arith.constant 0 : i32
    %c0_i32_0 = arith.constant 0 : i32
    return %c0_i32, %arg0 : i32, i32
  }
  func.func @transform_1(%arg0: i32) -> (i32, i32) {
    %c0_i32 = arith.constant 0 : i32
    %c0_i32_0 = arith.constant 0 : i32
    %c0_i32_1 = arith.constant 0 : i32
    return %c0_i32, %c0_i32_0 : i32, i32
  }
  func.func @transform_2(%arg0: i32) -> (i32, i32) {
    %c0_i32 = arith.constant 0 : i32
    %c0_i32_0 = arith.constant 0 : i32
    %c0_i32_1 = arith.constant 0 : i32
    return %c0_i32, %c0_i32_0 : i32, i32
  }
  func.func @transform_3(%arg0: i32) -> (i32, i32) {
    %c0_i32 = arith.constant 0 : i32
    %c0_i32_0 = arith.constant 0 : i32
    %c0_i32_1 = arith.constant 0 : i32
    return %c0_i32, %c0_i32_0 : i32, i32
  }
  func.func @transform_4(%arg0: i32) -> (i32, i32) {
    %c0_i32 = arith.constant 0 : i32
    %c0_i32_0 = arith.constant 0 : i32
    %c0_i32_1 = arith.constant 0 : i32
    return %c0_i32, %c0_i32_0 : i32, i32
  }
  func.func @transform_5(%arg0: i32) -> (i32, i32) {
    %c0_i32 = arith.constant 0 : i32
    %c0_i32_0 = arith.constant 0 : i32
    return %c0_i32, %arg0 : i32, i32
  }
}

</mosaic_0001>

<llo_original>
// kernel: dueling_dqn_forward.1
$region0: #{dueling_dqn_forward.1}
  #allocation0 [shape = 'u32[]', space=smem, size = 0x4, offset = 0x4, fixed_abs, tag = 'smem constant byte address 0x4 - core index']
  #allocation1 [shape = 'u32[72,128]{1,0:T(1,128)}', space=vmem, size = 0x9000, scoped, tag = 'internal scratch']
  %s0 = inlined_call_operand.vmem [shape: f32[4,128], index: 0, kind: input, shape index: {}]
  %s1 = inlined_call_operand.vmem [shape: f32[256,4], index: 1, kind: input, shape index: {}]
  %s2 = inlined_call_operand.vmem [shape: f32[256,1], index: 2, kind: input, shape index: {}]
  %s3 = inlined_call_operand.vmem [shape: f32[5,256], index: 3, kind: input, shape index: {}]
  %s4 = inlined_call_operand.vmem [shape: f32[5,1], index: 4, kind: input, shape index: {}]
  %s5 = inlined_call_operand.vmem [shape: f32[5,128], index: 5, kind: output, shape index: {}]
  %s6 = sld [smem:[#allocation0]]
  $region30: #{dueling_dqn_forward.1} parent=0
    _
  %s8 = ssub.s32 1, %s6
  %s9 = scalar_select 0, %s8, %s6
  // Predicated region
  $region2: #{dueling_dqn_forward.1} parent=0 // pred_check
    _
  $region3: #{dueling_dqn_forward.1} parent=0 // pred_check_branch
    %11 = sbr.rel (0) target = $region5
  $region4: #{dueling_dqn_forward.1} parent=0 // pred_region
    _
  $region5: #{dueling_dqn_forward.1} parent=0 // pred_fallthru
    _
  // Predicated region
  $region6: #{dueling_dqn_forward.1} parent=0 // pred_check
    _
  $region7: #{dueling_dqn_forward.1} parent=0 // pred_check_branch
    %13 = sbr.rel (0) target = $region9
  $region8: #{dueling_dqn_forward.1} parent=0 // pred_region
    _
  $region9: #{dueling_dqn_forward.1} parent=0 // pred_fallthru
    _
  // Predicated region
  $region10: #{dueling_dqn_forward.1} parent=0 // pred_check
    _
  $region11: #{dueling_dqn_forward.1} parent=0 // pred_check_branch
    %15 = sbr.rel (0) target = $region13
  $region12: #{dueling_dqn_forward.1} parent=0 // pred_region
    _
  $region13: #{dueling_dqn_forward.1} parent=0 // pred_fallthru
    _
  // Predicated region
  $region14: #{dueling_dqn_forward.1} parent=0 // pred_check
    _
  $region15: #{dueling_dqn_forward.1} parent=0 // pred_check_branch
    %17 = sbr.rel (0) target = $region17
  $region16: #{dueling_dqn_forward.1} parent=0 // pred_region
    _
  $region17: #{dueling_dqn_forward.1} parent=0 // pred_fallthru
    _
  // Predicated region
  $region18: #{dueling_dqn_forward.1} parent=0 // pred_check
    _
  $region19: #{dueling_dqn_forward.1} parent=0 // pred_check_branch
    %19 = sbr.rel (0) target = $region21
  $region20: #{dueling_dqn_forward.1} parent=0 // pred_region
    _
  $region21: #{dueling_dqn_forward.1} parent=0 // pred_fallthru
    _
  %v20 = vld [vmem:[%s1] sm:$0xff]
  %v21 = vld [vmem:[%s1 + $0x8] sm:$0xff]
  %v22 = vld [vmem:[%s1 + $0x10] sm:$0xff]
  %v23 = vld [vmem:[%s1 + $0x18] sm:$0xff]
  %v24 = vld [vmem:[%s1 + $0x20] sm:$0xff]
  %v25 = vld [vmem:[%s1 + $0x28] sm:$0xff]
  %v26 = vld [vmem:[%s1 + $0x30] sm:$0xff]
  %v27 = vld [vmem:[%s1 + $0x38] sm:$0xff]
  %v28 = vld [vmem:[%s1 + $0x40] sm:$0xff]
  %v29 = vld [vmem:[%s1 + $0x48] sm:$0xff]
  %v30 = vld [vmem:[%s1 + $0x50] sm:$0xff]
  %v31 = vld [vmem:[%s1 + $0x58] sm:$0xff]
  %v32 = vld [vmem:[%s1 + $0x60] sm:$0xff]
  %v33 = vld [vmem:[%s1 + $0x68] sm:$0xff]
  %v34 = vld [vmem:[%s1 + $0x70] sm:$0xff]
  %v35 = vld [vmem:[%s1 + $0x78] sm:$0xff]
  %v36 = vld [vmem:[%s1 + $0x80] sm:$0xff]
  %v37 = vld [vmem:[%s1 + $0x88] sm:$0xff]
  %v38 = vld [vmem:[%s1 + $0x90] sm:$0xff]
  %v39 = vld [vmem:[%s1 + $0x98] sm:$0xff]
  %v40 = vld [vmem:[%s1 + $0xa0] sm:$0xff]
  %v41 = vld [vmem:[%s1 + $0xa8] sm:$0xff]
  %v42 = vld [vmem:[%s1 + $0xb0] sm:$0xff]
  %v43 = vld [vmem:[%s1 + $0xb8] sm:$0xff]
  %v44 = vld [vmem:[%s1 + $0xc0] sm:$0xff]
  %v45 = vld [vmem:[%s1 + $0xc8] sm:$0xff]
  %v46 = vld [vmem:[%s1 + $0xd0] sm:$0xff]
  %v47 = vld [vmem:[%s1 + $0xd8] sm:$0xff]
  %v48 = vld [vmem:[%s1 + $0xe0] sm:$0xff]
  %v49 = vld [vmem:[%s1 + $0xe8] sm:$0xff]
  %v50 = vld [vmem:[%s1 + $0xf0] sm:$0xff]
  %v51 = vld [vmem:[%s1 + $0xf8] sm:$0xff]
  %v52 = vld [vmem:[%s0] sm:$0xf]
  %v53 = vld [vmem:[%s2] sm:$0xff]
  %v54 = vld [vmem:[%s2 + $0x8] sm:$0xff]
  %v55 = vld [vmem:[%s2 + $0x10] sm:$0xff]
  %v56 = vld [vmem:[%s2 + $0x18] sm:$0xff]
  %v57 = vld [vmem:[%s2 + $0x20] sm:$0xff]
  %v58 = vld [vmem:[%s2 + $0x28] sm:$0xff]
  %v59 = vld [vmem:[%s2 + $0x30] sm:$0xff]
  %v60 = vld [vmem:[%s2 + $0x38] sm:$0xff]
  %v61 = vld [vmem:[%s2 + $0x40] sm:$0xff]
  %v62 = vld [vmem:[%s2 + $0x48] sm:$0xff]
  %v63 = vld [vmem:[%s2 + $0x50] sm:$0xff]
  %v64 = vld [vmem:[%s2 + $0x58] sm:$0xff]
  %v65 = vld [vmem:[%s2 + $0x60] sm:$0xff]
  %v66 = vld [vmem:[%s2 + $0x68] sm:$0xff]
  %v67 = vld [vmem:[%s2 + $0x70] sm:$0xff]
  %v68 = vld [vmem:[%s2 + $0x78] sm:$0xff]
  %v69 = vld [vmem:[%s2 + $0x80] sm:$0xff]
  %v70 = vld [vmem:[%s2 + $0x88] sm:$0xff]
  %v71 = vld [vmem:[%s2 + $0x90] sm:$0xff]
  %v72 = vld [vmem:[%s2 + $0x98] sm:$0xff]
  %v73 = vld [vmem:[%s2 + $0xa0] sm:$0xff]
  %v74 = vld [vmem:[%s2 + $0xa8] sm:$0xff]
  %v75 = vld [vmem:[%s2 + $0xb0] sm:$0xff]
  %v76 = vld [vmem:[%s2 + $0xb8] sm:$0xff]
  %v77 = vld [vmem:[%s2 + $0xc0] sm:$0xff]
  %v78 = vld [vmem:[%s2 + $0xc8] sm:$0xff]
  %v79 = vld [vmem:[%s2 + $0xd0] sm:$0xff]
  %v80 = vld [vmem:[%s2 + $0xd8] sm:$0xff]
  %v81 = vld [vmem:[%s2 + $0xe0] sm:$0xff]
  %v82 = vld [vmem:[%s2 + $0xe8] sm:$0xff]
  %v83 = vld [vmem:[%s2 + $0xf0] sm:$0xff]
  %v84 = vld [vmem:[%s2 + $0xf8] sm:$0xff]
  %86 = vset.pattern.permute.xlu0 0
  %87 = vperm.xlu0 %86, %v53
  %v88 = vpop.permute.xlu0 %87
  %91 = vset.pattern.permute.xlu0 0
  %92 = vperm.xlu0 %91, %v54
  %v93 = vpop.permute.xlu0 %92
  %96 = vset.pattern.permute.xlu0 0
  %97 = vperm.xlu0 %96, %v55
  %v98 = vpop.permute.xlu0 %97
  %101 = vset.pattern.permute.xlu0 0
  %102 = vperm.xlu0 %101, %v56
  %v103 = vpop.permute.xlu0 %102
  %106 = vset.pattern.permute.xlu0 0
  %107 = vperm.xlu0 %106, %v57
  %v108 = vpop.permute.xlu0 %107
  %111 = vset.pattern.permute.xlu0 0
  %112 = vperm.xlu0 %111, %v58
  %v113 = vpop.permute.xlu0 %112
  %116 = vset.pattern.permute.xlu0 0
  %117 = vperm.xlu0 %116, %v59
  %v118 = vpop.permute.xlu0 %117
  %121 = vset.pattern.permute.xlu0 0
  %122 = vperm.xlu0 %121, %v60
  %v123 = vpop.permute.xlu0 %122
  %126 = vset.pattern.permute.xlu0 0
  %127 = vperm.xlu0 %126, %v61
  %v128 = vpop.permute.xlu0 %127
  %131 = vset.pattern.permute.xlu0 0
  %132 = vperm.xlu0 %131, %v62
  %v133 = vpop.permute.xlu0 %132
  %136 = vset.pattern.permute.xlu0 0
  %137 = vperm.xlu0 %136, %v63
  %v138 = vpop.permute.xlu0 %137
  %141 = vset.pattern.permute.xlu0 0
  %142 = vperm.xlu0 %141, %v64
  %v143 = vpop.permute.xlu0 %142
  %146 = vset.pattern.permute.xlu0 0
  %147 = vperm.xlu0 %146, %v65
  %v148 = vpop.permute.xlu0 %147
  %151 = vset.pattern.permute.xlu0 0
  %152 = vperm.xlu0 %151, %v66
  %v153 = vpop.permute.xlu0 %152
  %156 = vset.pattern.permute.xlu0 0
  %157 = vperm.xlu0 %156, %v67
  %v158 = vpop.permute.xlu0 %157
  %161 = vset.pattern.permute.xlu0 0
  %162 = vperm.xlu0 %161, %v68
  %v163 = vpop.permute.xlu0 %162
  %166 = vset.pattern.permute.xlu0 0
  %167 = vperm.xlu0 %166, %v69
  %v168 = vpop.permute.xlu0 %167
  %171 = vset.pattern.permute.xlu0 0
  %172 = vperm.xlu0 %171, %v70
  %v173 = vpop.permute.xlu0 %172
  %176 = vset.pattern.permute.xlu0 0
  %177 = vperm.xlu0 %176, %v71
  %v178 = vpop.permute.xlu0 %177
  %181 = vset.pattern.permute.xlu0 0
  %182 = vperm.xlu0 %181, %v72
  %v183 = vpop.permute.xlu0 %182
  %186 = vset.pattern.permute.xlu0 0
  %187 = vperm.xlu0 %186, %v73
  %v188 = vpop.permute.xlu0 %187
  %191 = vset.pattern.permute.xlu0 0
  %192 = vperm.xlu0 %191, %v74
  %v193 = vpop.permute.xlu0 %192
  %196 = vset.pattern.permute.xlu0 0
  %197 = vperm.xlu0 %196, %v75
  %v198 = vpop.permute.xlu0 %197
  %201 = vset.pattern.permute.xlu0 0
  %202 = vperm.xlu0 %201, %v76
  %v203 = vpop.permute.xlu0 %202
  %206 = vset.pattern.permute.xlu0 0
  %207 = vperm.xlu0 %206, %v77
  %v208 = vpop.permute.xlu0 %207
  %211 = vset.pattern.permute.xlu0 0
  %212 = vperm.xlu0 %211, %v78
  %v213 = vpop.permute.xlu0 %212
  %216 = vset.pattern.permute.xlu0 0
  %217 = vperm.xlu0 %216, %v79
  %v218 = vpop.permute.xlu0 %217
  %221 = vset.pattern.permute.xlu0 0
  %222 = vperm.xlu0 %221, %v80
  %v223 = vpop.permute.xlu0 %222
  %226 = vset.pattern.permute.xlu0 0
  %227 = vperm.xlu0 %226, %v81
  %v228 = vpop.permute.xlu0 %227
  %231 = vset.pattern.permute.xlu0 0
  %232 = vperm.xlu0 %231, %v82
  %v233 = vpop.permute.xlu0 %232
  %236 = vset.pattern.permute.xlu0 0
  %237 = vperm.xlu0 %236, %v83
  %v238 = vpop.permute.xlu0 %237
  %241 = vset.pattern.permute.xlu0 0
  %242 = vperm.xlu0 %241, %v84
  %v243 = vpop.permute.xlu0 %242
  %vm245 = vcmask 31744
  %v247 = vsel %vm245, %v20, 0
  %v250 = vsel %vm245, %v21, 0
  %v253 = vsel %vm245, %v22, 0
  %v256 = vsel %vm245, %v23, 0
  %v259 = vsel %vm245, %v24, 0
  %v262 = vsel %vm245, %v25, 0
  %v265 = vsel %vm245, %v26, 0
  %v268 = vsel %vm245, %v27, 0
  %v271 = vsel %vm245, %v28, 0
  %v274 = vsel %vm245, %v29, 0
  %v277 = vsel %vm245, %v30, 0
  %v280 = vsel %vm245, %v31, 0
  %v283 = vsel %vm245, %v32, 0
  %v286 = vsel %vm245, %v33, 0
  %v289 = vsel %vm245, %v34, 0
  %v292 = vsel %vm245, %v35, 0
  %v295 = vsel %vm245, %v36, 0
  %v298 = vsel %vm245, %v37, 0
  %v301 = vsel %vm245, %v38, 0
  %v304 = vsel %vm245, %v39, 0
  %v307 = vsel %vm245, %v40, 0
  %v310 = vsel %vm245, %v41, 0
  %v313 = vsel %vm245, %v42, 0
  %v316 = vsel %vm245, %v43, 0
  %v319 = vsel %vm245, %v44, 0
  %v322 = vsel %vm245, %v45, 0
  %v325 = vsel %vm245, %v46, 0
  %v328 = vsel %vm245, %v47, 0
  %v331 = vsel %vm245, %v48, 0
  %v334 = vsel %vm245, %v49, 0
  %v337 = vsel %vm245, %v50, 0
  %v340 = vsel %vm245, %v51, 0
  %vm342 = vcmask 1043456
  %v344 = vsel %vm342, %v52, 0
  %346 = vmatpush.msra.mxu0 0.0
  %347 = vmatpush.msra.mxu0 0.0
  %348 = vmatpush.msra.mxu0 0.0
  %349 = vmatpush.msra.mxu0 0.0
  %350 = vmatpush.msra.mxu0 0.0
  %351 = vmatpush.msra.mxu0 0.0
  %352 = vmatpush.msra.mxu0 0.0
  %353 = vmatpush.msra.mxu0 0.0
  %354 = vmatpush.msra.mxu0 0.0
  %355 = vmatpush.msra.mxu0 0.0
  %356 = vmatpush.msra.mxu0 0.0
  %357 = vmatpush.msra.mxu0 0.0
  %358 = vmatpush.msra.mxu0 0.0
  %359 = vmatpush.msra.mxu0 0.0
  %360 = vmatpush.msra.mxu0 0.0
  %361 = vmatpush.msra.mxu0 %v344
  %362 = vmatmul.f32.gmra.mxu0 %v247
  %v363 = vpop.f32.mrf.mxu0
  %v364 = vadd.f32 %v88, %v363
  %365 = vmatmul.f32.gmra.mxu0 %v250
  %v366 = vpop.f32.mrf.mxu0
  %v367 = vadd.f32 %v93, %v366
  %368 = vmatmul.f32.gmra.mxu0 %v253
  %v369 = vpop.f32.mrf.mxu0
  %v370 = vadd.f32 %v98, %v369
  %371 = vmatmul.f32.gmra.mxu0 %v256
  %v372 = vpop.f32.mrf.mxu0
  %v373 = vadd.f32 %v103, %v372
  %374 = vmatmul.f32.gmra.mxu0 %v259
  %v375 = vpop.f32.mrf.mxu0
  %v376 = vadd.f32 %v108, %v375
  %377 = vmatmul.f32.gmra.mxu0 %v262
  %v378 = vpop.f32.mrf.mxu0
  %v379 = vadd.f32 %v113, %v378
  %380 = vmatmul.f32.gmra.mxu0 %v265
  %v381 = vpop.f32.mrf.mxu0
  %v382 = vadd.f32 %v118, %v381
  %383 = vmatmul.f32.gmra.mxu0 %v268
  %v384 = vpop.f32.mrf.mxu0
  %v385 = vadd.f32 %v123, %v384
  %386 = vmatmul.f32.gmra.mxu0 %v271
  %v387 = vpop.f32.mrf.mxu0
  %v388 = vadd.f32 %v128, %v387
  %389 = vmatmul.f32.gmra.mxu0 %v274
  %v390 = vpop.f32.mrf.mxu0
  %v391 = vadd.f32 %v133, %v390
  %392 = vmatmul.f32.gmra.mxu0 %v277
  %v393 = vpop.f32.mrf.mxu0
  %v394 = vadd.f32 %v138, %v393
  %395 = vmatmul.f32.gmra.mxu0 %v280
  %v396 = vpop.f32.mrf.mxu0
  %v397 = vadd.f32 %v143, %v396
  %398 = vmatmul.f32.gmra.mxu0 %v283
  %v399 = vpop.f32.mrf.mxu0
  %v400 = vadd.f32 %v148, %v399
  %401 = vmatmul.f32.gmra.mxu0 %v286
  %v402 = vpop.f32.mrf.mxu0
  %v403 = vadd.f32 %v153, %v402
  %404 = vmatmul.f32.gmra.mxu0 %v289
  %v405 = vpop.f32.mrf.mxu0
  %v406 = vadd.f32 %v158, %v405
  %407 = vmatmul.f32.gmra.mxu0 %v292
  %v408 = vpop.f32.mrf.mxu0
  %v409 = vadd.f32 %v163, %v408
  %410 = vmatmul.f32.gmra.mxu0 %v295
  %v411 = vpop.f32.mrf.mxu0
  %v412 = vadd.f32 %v168, %v411
  %413 = vmatmul.f32.gmra.mxu0 %v298
  %v414 = vpop.f32.mrf.mxu0
  %v415 = vadd.f32 %v173, %v414
  %416 = vmatmul.f32.gmra.mxu0 %v301
  %v417 = vpop.f32.mrf.mxu0
  %v418 = vadd.f32 %v178, %v417
  %419 = vmatmul.f32.gmra.mxu0 %v304
  %v420 = vpop.f32.mrf.mxu0
  %v421 = vadd.f32 %v183, %v420
  %422 = vmatmul.f32.gmra.mxu0 %v307
  %v423 = vpop.f32.mrf.mxu0
  %v424 = vadd.f32 %v188, %v423
  %425 = vmatmul.f32.gmra.mxu0 %v310
  %v426 = vpop.f32.mrf.mxu0
  %v427 = vadd.f32 %v193, %v426
  %428 = vmatmul.f32.gmra.mxu0 %v313
  %v429 = vpop.f32.mrf.mxu0
  %v430 = vadd.f32 %v198, %v429
  %431 = vmatmul.f32.gmra.mxu0 %v316
  %v432 = vpop.f32.mrf.mxu0
  %v433 = vadd.f32 %v203, %v432
  %434 = vmatmul.f32.gmra.mxu0 %v319
  %v435 = vpop.f32.mrf.mxu0
  %v436 = vadd.f32 %v208, %v435
  %437 = vmatmul.f32.gmra.mxu0 %v322
  %v438 = vpop.f32.mrf.mxu0
  %v439 = vadd.f32 %v213, %v438
  %440 = vmatmul.f32.gmra.mxu0 %v325
  %v441 = vpop.f32.mrf.mxu0
  %v442 = vadd.f32 %v218, %v441
  %443 = vmatmul.f32.gmra.mxu0 %v328
  %v444 = vpop.f32.mrf.mxu0
  %v445 = vadd.f32 %v223, %v444
  %446 = vmatmul.f32.gmra.mxu0 %v331
  %v447 = vpop.f32.mrf.mxu0
  %v448 = vadd.f32 %v228, %v447
  %449 = vmatmul.f32.gmra.mxu0 %v334
  %v450 = vpop.f32.mrf.mxu0
  %v451 = vadd.f32 %v233, %v450
  %452 = vmatmul.f32.gmra.mxu0 %v337
  %v453 = vpop.f32.mrf.mxu0
  %v454 = vadd.f32 %v238, %v453
  %455 = vmatmul.f32.gmra.mxu0 %v340
  %v456 = vpop.f32.mrf.mxu0
  %v457 = vadd.f32 %v243, %v456
  %458 = vdwg.mxu0
  %v459 = vmax.f32 %v364, 0.0
  %v460 = vmax.f32 %v367, 0.0
  %v461 = vmax.f32 %v370, 0.0
  %v462 = vmax.f32 %v373, 0.0
  %v463 = vmax.f32 %v376, 0.0
  %v464 = vmax.f32 %v379, 0.0
  %v465 = vmax.f32 %v382, 0.0
  %v466 = vmax.f32 %v385, 0.0
  %v467 = vmax.f32 %v388, 0.0
  %v468 = vmax.f32 %v391, 0.0
  %v469 = vmax.f32 %v394, 0.0
  %v470 = vmax.f32 %v397, 0.0
  %v471 = vmax.f32 %v400, 0.0
  %v472 = vmax.f32 %v403, 0.0
  %v473 = vmax.f32 %v406, 0.0
  %v474 = vmax.f32 %v409, 0.0
  %v475 = vmax.f32 %v412, 0.0
  %v476 = vmax.f32 %v415, 0.0
  %v477 = vmax.f32 %v418, 0.0
  %v478 = vmax.f32 %v421, 0.0
  %v479 = vmax.f32 %v424, 0.0
  %v480 = vmax.f32 %v427, 0.0
  %v481 = vmax.f32 %v430, 0.0
  %v482 = vmax.f32 %v433, 0.0
  %v483 = vmax.f32 %v436, 0.0
  %v484 = vmax.f32 %v439, 0.0
  %v485 = vmax.f32 %v442, 0.0
  %v486 = vmax.f32 %v445, 0.0
  %v487 = vmax.f32 %v448, 0.0
  %v488 = vmax.f32 %v451, 0.0
  %v489 = vmax.f32 %v454, 0.0
  %v490 = vmax.f32 %v457, 0.0
  %v491 = vld [vmem:[%s3] sm:$0x1f]
  %v492 = vld [vmem:[%s3 + $0x8] sm:$0x1f]
  %v493 = vld [vmem:[%s4] sm:$0x1f]
  %495 = vset.pattern.permute.xlu0 0
  %496 = vperm.xlu0 %495, %v493
  %v497 = vpop.permute.xlu0 %496
  %499 = vmatpush.msra.mxu0 %v474
  %500 = vmatpush.msra.mxu0 %v473
  %501 = vmatpush.msra.mxu0 %v472
  %502 = vmatpush.msra.mxu0 %v471
  %503 = vmatpush.msra.mxu0 %v470
  %504 = vmatpush.msra.mxu0 %v469
  %505 = vmatpush.msra.mxu0 %v468
  %506 = vmatpush.msra.mxu0 %v467
  %507 = vmatpush.msra.mxu0 %v466
  %508 = vmatpush.msra.mxu0 %v465
  %509 = vmatpush.msra.mxu0 %v464
  %510 = vmatpush.msra.mxu0 %v463
  %511 = vmatpush.msra.mxu0 %v462
  %512 = vmatpush.msra.mxu0 %v461
  %513 = vmatpush.msra.mxu0 %v460
  %514 = vmatpush.msra.mxu0 %v459
  %515 = vmatmul.f32.gmra.mxu0 %v491
  %v516 = vpop.f32.mrf.mxu0
  %v517 = vadd.f32 %v497, %v516
  %518 = vdwg.mxu0
  %519 = vmatpush.msra.mxu0 %v490
  %520 = vmatpush.msra.mxu0 %v489
  %521 = vmatpush.msra.mxu0 %v488
  %522 = vmatpush.msra.mxu0 %v487
  %523 = vmatpush.msra.mxu0 %v486
  %524 = vmatpush.msra.mxu0 %v485
  %525 = vmatpush.msra.mxu0 %v484
  %526 = vmatpush.msra.mxu0 %v483
  %527 = vmatpush.msra.mxu0 %v482
  %528 = vmatpush.msra.mxu0 %v481
  %529 = vmatpush.msra.mxu0 %v480
  %530 = vmatpush.msra.mxu0 %v479
  %531 = vmatpush.msra.mxu0 %v478
  %532 = vmatpush.msra.mxu0 %v477
  %533 = vmatpush.msra.mxu0 %v476
  %534 = vmatpush.msra.mxu0 %v475
  %535 = vmatmul.f32.gmra.mxu0 %v492
  %v536 = vpop.f32.mrf.mxu0
  %v537 = vadd.f32 %v517, %v536
  %538 = vdwg.mxu0
  %539 = vst [vmem:[%s5] sm:$0x1f] %v537
  // Predicated region
  $region22: #{dueling_dqn_forward.1} parent=0 // pred_check
    _
  $region23: #{dueling_dqn_forward.1} parent=0 // pred_check_branch
    %541 = sbr.rel (0) target = $region25
  $region24: #{dueling_dqn_forward.1} parent=0 // pred_region
    _
  $region25: #{dueling_dqn_forward.1} parent=0 // pred_fallthru
    _
  // Predicated region
  $region26: #{dueling_dqn_forward.1} parent=0 // pred_check
    _
  $region27: #{dueling_dqn_forward.1} parent=0 // pred_check_branch
    %543 = sbr.rel (0) target = $region29
  $region28: #{dueling_dqn_forward.1} parent=0 // pred_region
    _
  $region29: #{dueling_dqn_forward.1} parent=0 // pred_fallthru
    _

</llo_original>
